<compile_context>
chip_gen: v5e
topology: v5e:2x2
jax: 0.10.0
libtpu: 0.0.40
codegen_flags: <defaults>
</compile_context>

<pallas_src>
import math

import jax
import jax.numpy as jnp
from jax.experimental import pallas as pl
from jax.experimental.pallas import tpu as pltpu


P_DROP = 0.5                      # module __init__ default
_LANE = 128                       # vreg lane width
_SUBLANE = 8                      # vreg sublane count
_TARGET_BLOCK_BYTES = 1 << 20     # ~1 MiB blocks: 85%+ of HBM roofline, well under scoped VMEM


def _dropout_seq_kernel(mask_ref, x_ref, o_ref):
    """mask_ref: (1, M) pre-scaled mask. x_ref / o_ref: (TILE_T, M) native dtype.

    The mask's index_map returns the same block for every grid step, so it
    stays resident in VMEM; the steady state is one broadcast VPU multiply per
    tile — purely HBM-bandwidth bound.
    """
    o_ref[...] = x_ref[...] * mask_ref[...]


def _make_mask(seed, m, p, dtype):
    """(1, m) inverted-dropout mask: 0 or 1/(1-p), shared across the sequence."""
    # TODO(synk): mask RNG runs in plain JAX (tiny (1, M) array) because the TPU
    # stateful PRNG primitives have no interpret-mode lowering in this sandbox.
    key = jax.random.PRNGKey(seed)
    keep = jax.random.bernoulli(key, 1.0 - p, (1, m))
    scale = jnp.float32(1.0 / (1.0 - p))
    return (keep.astype(jnp.float32) * scale).astype(dtype)


def _round_up(x, n):
    return ((x + n - 1) // n) * n


def dropout_seq_forward(x_seq, seed, *, p=P_DROP, training=True):
    """Forward pass of Dropout_Seq.  x_seq: (T, batch, ...features)."""
    assert 0.0 <= p < 1.0
    if not training or p == 0.0:
        return x_seq                              # eval mode / p=0: identity, no launch

    t = x_seq.shape[0]
    m = math.prod(x_seq.shape[1:])
    dtype = x_seq.dtype
    x2 = x_seq.reshape(t, m)                      # native dtype, no upcast

    # Lane-dense feature axis (multiple of 128).
    m_pad = _round_up(m, _LANE)

    # Row tile sized so one block is ~1 MiB; multiple of 8 sublanes.
    itemsize = jnp.dtype(dtype).itemsize
    rows = max(1, _TARGET_BLOCK_BYTES // (m_pad * itemsize))
    tile_t = max(_SUBLANE, _round_up(min(rows, t), _SUBLANE))
    t_pad = _round_up(t, tile_t)

    if (t_pad, m_pad) != (t, m):
        x2 = jnp.pad(x2, ((0, t_pad - t), (0, m_pad - m)))

    mask = _make_mask(seed, m_pad, p, dtype)      # (1, m_pad), already 1/(1-p) scaled

    out = pl.pallas_call(
        _dropout_seq_kernel,
        out_shape=jax.ShapeDtypeStruct((t_pad, m_pad), dtype),
        grid=(t_pad // tile_t,),
        in_specs=[
            pl.BlockSpec((1, m_pad), lambda i: (0, 0)),        # mask: same block every step
            pl.BlockSpec((tile_t, m_pad), lambda i: (i, 0)),   # x row tile
        ],
        out_specs=pl.BlockSpec((tile_t, m_pad), lambda i: (i, 0)),
        compiler_params=pltpu.CompilerParams(
            dimension_semantics=("parallel",),                 # shard row tiles across v7x cores
        ),
    )(mask, x2)

    if (t_pad, m_pad) != (t, m):
        out = out[:t, :m]
    return out.reshape(x_seq.shape)


# ---------------------------------------------------------------------------
if __name__ == "__main__":
    key = jax.random.PRNGKey(0)
    T, B, H = 8, 2, 32                            # seq=8, batch=2, hidden=32 (M=64 -> exercises padding)
    x = jax.random.normal(key, (T, B, H), dtype=jnp.float32)
    seed = 1234

    out = jax.block_until_ready(dropout_seq_forward(x, seed, p=P_DROP, training=True))

    # --- correctness checks against the module's semantics ---
    assert out.shape == x.shape and out.dtype == x.dtype, (out.shape, out.dtype)

    M = B * H
    mask_ref = _make_mask(seed, _round_up(M, _LANE), P_DROP, x.dtype)[0, :M]
    mask_ref = mask_ref.reshape(B, H)             # one mask per (batch, feature)
    expected = x * mask_ref[None]                 # SAME mask applied to every time step
    assert float(jnp.max(jnp.abs(out - expected))) < 1e-6, \
        float(jnp.max(jnp.abs(out - expected)))

    # Dropped entries are exactly zero; kept entries are scaled by 1/(1-p).
    keep = (mask_ref != 0.0).astype(jnp.float32)
    assert float(jnp.max(jnp.abs(out - x * keep[None] * (1.0 / (1.0 - P_DROP))))) < 1e-6
    frac_dropped = 1.0 - float(jnp.mean(keep))    # loose statistical sanity check (64 samples)
    assert 0.2 < frac_dropped < 0.8, frac_dropped

    # Eval mode is identity.
    out_eval = jax.block_until_ready(dropout_seq_forward(x, seed, p=P_DROP, training=False))
    assert jnp.array_equal(out_eval, x)

    print("KERNEL_OK")
</pallas_src>

<mosaic_0001>
module attributes {stable_mosaic.version = 11 : i64} {
  func.func @_dropout_seq_kernel(%arg0: i32, %arg1: memref<1x128xf32, #tpu.memory_space<vmem>>, %arg2: memref<8x128xf32, #tpu.memory_space<vmem>>, %arg3: memref<8x128xf32, #tpu.memory_space<vmem>>) attributes {dimension_semantics = [#tpu.dimension_semantics<parallel>], iteration_bounds = array<i64: 1>, scalar_prefetch = 0 : i64, scratch_operands = 0 : i64, tpu.core_type = #tpu.core_type<tc>, window_params = [{pipeline_mode = #tpu.pipeline_mode<synchronous>, transform_indices = @transform_0, window_bounds = array<i64: 1, 128>}, {transform_indices = @transform_1, window_bounds = array<i64: 8, 128>}, {transform_indices = @transform_2, window_bounds = array<i64: 8, 128>}]} {
    %c0 = arith.constant 0 : index
    %c0_0 = arith.constant 0 : index
    %0 = vector.load %arg2[%c0, %c0_0] : memref<8x128xf32, #tpu.memory_space<vmem>>, vector<8x128xf32>
    %c0_1 = arith.constant 0 : index
    %c0_2 = arith.constant 0 : index
    %1 = vector.load %arg1[%c0_1, %c0_2] : memref<1x128xf32, #tpu.memory_space<vmem>>, vector<1x128xf32>
    %2 = vector.broadcast %1 : vector<1x128xf32> to vector<8x128xf32>
    %3 = arith.mulf %0, %2 : vector<8x128xf32>
    %c0_3 = arith.constant 0 : index
    %c0_4 = arith.constant 0 : index
    %4 = vector.load %arg3[%c0_3, %c0_4] : memref<8x128xf32, #tpu.memory_space<vmem>>, vector<8x128xf32>
    tpu.vector_store %arg3[%c0_3, %c0_4], %3 {strides = array<i32>} : memref<8x128xf32, #tpu.memory_space<vmem>>, vector<8x128xf32>,
    return
  }
  func.func @transform_0(%arg0: i32) -> (i32, i32) {
    %c0_i32 = arith.constant 0 : i32
    %c0_i32_0 = arith.constant 0 : i32
    %c0_i32_1 = arith.constant 0 : i32
    return %c0_i32, %c0_i32_0 : i32, i32
  }
  func.func @transform_1(%arg0: i32) -> (i32, i32) {
    %c0_i32 = arith.constant 0 : i32
    %c0_i32_0 = arith.constant 0 : i32
    return %arg0, %c0_i32 : i32, i32
  }
  func.func @transform_2(%arg0: i32) -> (i32, i32) {
    %c0_i32 = arith.constant 0 : i32
    %c0_i32_0 = arith.constant 0 : i32
    return %arg0, %c0_i32 : i32, i32
  }
}

</mosaic_0001>

<llo_original>
// kernel: tpu_custom_call.1
$region0: #{tpu_custom_call.1}
  #allocation0 [shape = 'u32[]', space=smem, size = 0x4, offset = 0x4, fixed_abs, tag = 'smem constant byte address 0x4 - core index']
  #allocation1 [shape = 'u32[72,128]{1,0:T(1,128)}', space=vmem, size = 0x9000, scoped, tag = 'internal scratch']
  %s0 = inlined_call_operand.hbm [shape: f32[1,128], index: 0, kind: input, shape index: {}]
  %s1 = inlined_call_operand.hbm [shape: f32[8,128], index: 1, kind: input, shape index: {}]
  %s2 = inlined_call_operand.hbm [shape: f32[8,128], index: 2, kind: output, shape index: {}]
  %s3 = sld [smem:[#allocation0]]
  $region26: #{tpu_custom_call.1} parent=0
    _
  %s5 = ssub.s32 1, %s3
  %s6 = scalar_select 0, %s5, %s3
  $region1: #{tpu_custom_call.1} parent=0
    #allocation2 [shape = 'u8[512]{0}', space=vmem, size = 0x400, scoped, tag = 'input window, operand 0, single buffered']
    #allocation3 [shape = 's32[1]{0}', space=sflag, size = 0x4, scoped, tag = 'scoped memory for tpu_custom_call.1']
    #allocation4 [shape = 's32[1]{0}', space=sflag, size = 0x4, scoped, tag = 'scoped memory for tpu_custom_call.1']
    #allocation5 [shape = 'u8[4096]{0}', space=vmem, size = 0x1000, scoped, tag = 'input window, operand 1, single buffered']
    #allocation6 [shape = 's32[1]{0}', space=sflag, size = 0x4, scoped, tag = 'scoped memory for tpu_custom_call.1']
    #allocation7 [shape = 'u8[4096]{0}', space=vmem, size = 0x1000, scoped, tag = 'output window, operand 0, single buffered']
    %7 = vsyncpa [#allocation3], 0
    %8 = vsyncpa [#allocation6], 0
    %9 = vsyncpa [#allocation4], 0
    // Predicated region
    $region2: #{tpu_custom_call.1} parent=1 // pred_check
      _
    $region3: #{tpu_custom_call.1} parent=1 // pred_check_branch
      %11 = sbr.rel (0) target = $region5
    $region4: #{tpu_custom_call.1} parent=1 // pred_region
      %13 = vsyncadd [#allocation3], 0
      %s15 = sshll.u32 %s0, 4
      %s16 = int_to_ptr.hbm [resolvable:$true] %s15
      %s17 = sshll.u32 [#allocation2], 4
      %s18 = int_to_ptr.vmem [resolvable:$true] %s17
      %20 = dma.hbm_to_vmem [thread:$0]  %s16, 16, %s18, [#allocation3]
    $region5: #{tpu_custom_call.1} parent=1 // pred_fallthru
      _
    // Predicated region
    $region6: #{tpu_custom_call.1} parent=1 // pred_check
      _
    $region7: #{tpu_custom_call.1} parent=1 // pred_check_branch
      %22 = sbr.rel (0) target = $region9
    $region8: #{tpu_custom_call.1} parent=1 // pred_region
      %24 = vsyncadd [#allocation6], 0
      %s26 = sshll.u32 %s1, 4
      %s27 = int_to_ptr.hbm [resolvable:$true] %s26
      %s28 = sshll.u32 [#allocation5], 4
      %s29 = int_to_ptr.vmem [resolvable:$true] %s28
      %31 = dma.hbm_to_vmem [thread:$0]  %s27, 128, %s29, [#allocation6]
    $region9: #{tpu_custom_call.1} parent=1 // pred_fallthru
      _
    // Predicated region
    $region10: #{tpu_custom_call.1} parent=1 // pred_check
      _
    $region11: #{tpu_custom_call.1} parent=1 // pred_check_branch
      %33 = sbr.rel (0) target = $region13
    $region12: #{tpu_custom_call.1} parent=1 // pred_region
      %35 = dma.done [#allocation3], 16
    $region13: #{tpu_custom_call.1} parent=1 // pred_fallthru
      _
    // Predicated region
    $region14: #{tpu_custom_call.1} parent=1 // pred_check
      _
    $region15: #{tpu_custom_call.1} parent=1 // pred_check_branch
      %37 = sbr.rel (0) target = $region17
    $region16: #{tpu_custom_call.1} parent=1 // pred_region
      %39 = dma.done [#allocation6], 128
    $region17: #{tpu_custom_call.1} parent=1 // pred_fallthru
      _
    %v40 = vld [vmem:[#allocation5] sm:$0xff]
    %v41 = vld [vmem:[#allocation2] sm:$0x1]
    %v43 = vperm.slane %v41, 0
    %v45 = vmul.f32 %v40, %v43
    %46 = vst [vmem:[#allocation7] sm:$0xff] %v45
    // Predicated region
    $region18: #{tpu_custom_call.1} parent=1 // pred_check
      _
    $region19: #{tpu_custom_call.1} parent=1 // pred_check_branch
      %48 = sbr.rel (0) target = $region21
    $region20: #{tpu_custom_call.1} parent=1 // pred_region
      %50 = vsyncadd [#allocation4], 0
      %s52 = sshll.u32 [#allocation7], 4
      %s53 = int_to_ptr.vmem [resolvable:$true] %s52
      %s54 = sshll.u32 %s2, 4
      %s55 = int_to_ptr.hbm [resolvable:$true] %s54
      %57 = dma.vmem_to_hbm [thread:$0]  %s53, 128, %s55, [#allocation4]
    $region21: #{tpu_custom_call.1} parent=1 // pred_fallthru
      _
    // Predicated region
    $region22: #{tpu_custom_call.1} parent=1 // pred_check
      _
    $region23: #{tpu_custom_call.1} parent=1 // pred_check_branch
      %59 = sbr.rel (0) target = $region25
    $region24: #{tpu_custom_call.1} parent=1 // pred_region
      %61 = dma.done [#allocation4], 128
    $region25: #{tpu_custom_call.1} parent=1 // pred_fallthru
      _
    %62 = vsyncpa [#allocation3], 1
    %63 = vsyncpa [#allocation6], 1
    %64 = vsyncpa [#allocation4], 1

</llo_original>
